<compile_context>
chip_gen: v5e
topology: v5e:2x2
jax: 0.10.0
libtpu: 0.0.40
codegen_flags: <defaults>
</compile_context>

<pallas_src>
import functools

import jax
import jax.numpy as jnp
from jax import lax
from jax.experimental import pallas as pl
from jax.experimental.pallas import tpu as pltpu

LN_EPS = 1e-5  # torch.nn.LayerNorm default


def _patch_embed_kernel(p_ref, w_ref, prm_ref, o_ref):
    # p_ref  : (TN, Kp)  bf16 im2col patches tile (K zero-padded -> exact)
    # w_ref  : (Kp, C2)  bf16 conv weight flattened as (c1*kh*kw, c2), K zero-padded
    # prm_ref: (3,  C2)  f32  rows = [conv bias, LN gamma, LN beta]
    # o_ref  : (TN, C2)  f32
    y = jnp.dot(p_ref[...], w_ref[...], preferred_element_type=jnp.float32)
    y = y + prm_ref[0:1, :]
    inv_c2 = 1.0 / y.shape[-1]
    mean = jnp.sum(y, axis=-1, keepdims=True) * inv_c2
    mean_sq = jnp.sum(y * y, axis=-1, keepdims=True) * inv_c2
    var = mean_sq - mean * mean                       # biased variance (PyTorch LN)
    y_hat = (y - mean) * lax.rsqrt(var + LN_EPS)
    o_ref[...] = (y_hat * prm_ref[1:2, :] + prm_ref[2:3, :]).astype(o_ref.dtype)


def _round_up(a, m):
    return ((a + m - 1) // m) * m


@functools.partial(
    jax.jit, static_argnames=("patch_size", "stride", "padding", "tn_tokens")
)
def patch_embed_forward(x, w, b, gamma, beta, *, patch_size=7, stride=4, padding=0,
                        tn_tokens=512):
    """x: (B, c1, H, W) NCHW.  w: (c2, c1, kh, kw), b/gamma/beta: (c2,).
    Returns (out (B, Ho*Wo, c2) f32, Ho, Wo)."""
    B, C1, _, _ = x.shape
    c2 = w.shape[0]
    kh = kw = patch_size

    if padding > 0:
        x = jnp.pad(x, ((0, 0), (0, 0), (padding, padding), (padding, padding)))
    Hp, Wp = x.shape[2], x.shape[3]
    Ho = (Hp - kh) // stride + 1
    Wo = (Wp - kw) // stride + 1
    N = B * Ho * Wo
    K = C1 * kh * kw

    Kp = _round_up(K, 128)                    # lane-clean contraction dim
    TN = min(tn_tokens, _round_up(N, 8))      # big token tile, multiple of 8
    N_pad = _round_up(N, TN)

    # --- im2col in bf16 (single materialized buffer, pad fused into one op) ---
    xb = x.astype(jnp.bfloat16)
    cols = []
    for i in range(kh):
        for j in range(kw):
            cols.append(xb[:, :, i:i + stride * (Ho - 1) + 1:stride,
                               j:j + stride * (Wo - 1) + 1:stride])  # (B, C1, Ho, Wo)
    # (kh*kw, B, C1, Ho, Wo) -> (B, Ho, Wo, C1, kh*kw): feature flatten order (c, i, j)
    # matches PyTorch weight.reshape(c2, c1*kh*kw).
    p = jnp.stack(cols, axis=0).transpose(1, 3, 4, 2, 0).reshape(N, K)
    patches = jnp.pad(p, ((0, N_pad - N), (0, Kp - K)))              # (N_pad, Kp) bf16

    w2d = jnp.pad(w.reshape(c2, K).T.astype(jnp.bfloat16), ((0, Kp - K), (0, 0)))
    params = jnp.stack([b, gamma, beta], axis=0).astype(jnp.float32)  # (3, c2)

    cost = pl.CostEstimate(
        flops=2 * N_pad * Kp * c2,
        transcendentals=N_pad,
        bytes_accessed=patches.size * 2 + w2d.size * 2 + params.size * 4 + N_pad * c2 * 4,
    )

    out = pl.pallas_call(
        _patch_embed_kernel,
        out_shape=jax.ShapeDtypeStruct((N_pad, c2), jnp.float32),
        grid_spec=pltpu.PrefetchScalarGridSpec(
            num_scalar_prefetch=0,
            grid=(N_pad // TN,),
            in_specs=[
                pl.BlockSpec((TN, Kp), lambda i: (i, 0)),
                pl.BlockSpec((Kp, c2), lambda i: (0, 0)),
                pl.BlockSpec((3, c2), lambda i: (0, 0)),
            ],
            out_specs=pl.BlockSpec((TN, c2), lambda i: (i, 0)),
        ),
        compiler_params=pltpu.CompilerParams(dimension_semantics=("parallel",)),
        cost_estimate=cost,
    )(patches, w2d, params)

    out = out[:N].reshape(B, Ho * Wo, c2)
    return out, Ho, Wo


def _reference(x, w, b, gamma, beta, patch_size, stride, padding):
    """Pure-JAX reference (inputs rounded to bf16 like the kernel, math in f32)."""
    xb = x.astype(jnp.bfloat16).astype(jnp.float32)
    wb = w.astype(jnp.bfloat16).astype(jnp.float32)
    y = lax.conv_general_dilated(
        xb, wb,
        window_strides=(stride, stride),
        padding=[(padding, padding), (padding, padding)],
        dimension_numbers=("NCHW", "OIHW", "NCHW"),
    ) + b.reshape(1, -1, 1, 1)
    B, C2, H, W = y.shape
    y = y.reshape(B, C2, H * W).transpose(0, 2, 1)  # (B, HW, C2)
    mean = jnp.mean(y, axis=-1, keepdims=True)
    var = jnp.mean((y - mean) ** 2, axis=-1, keepdims=True)
    y = (y - mean) / jnp.sqrt(var + LN_EPS) * gamma + beta
    return y, H, W


if __name__ == "__main__":
    # Small config consistent with the module: c1=4, c2=32, patch_size=7, stride=4, padding=0
    B, C1, C2 = 2, 4, 32
    PATCH, STRIDE, PAD = 7, 4, 0
    H = W = 23  # -> Ho = Wo = (23 - 7)//4 + 1 = 5

    key = jax.random.PRNGKey(0)
    kx, kw_, kb = jax.random.split(key, 3)
    x = jax.random.normal(kx, (B, C1, H, W), jnp.float32)
    w = jax.random.normal(kw_, (C2, C1, PATCH, PATCH), jnp.float32) * 0.02
    b = jax.random.normal(kb, (C2,), jnp.float32) * 0.01
    gamma = jnp.ones((C2,), jnp.float32)
    beta = jnp.zeros((C2,), jnp.float32)

    out, Ho, Wo = patch_embed_forward(
        x, w, b, gamma, beta, patch_size=PATCH, stride=STRIDE, padding=PAD
    )
    out = jax.block_until_ready(out)

    ref, Hr, Wr = _reference(x, w, b, gamma, beta, PATCH, STRIDE, PAD)
    assert (Ho, Wo) == (Hr, Wr)
    assert out.shape == (B, Ho * Wo, C2)
    assert jnp.max(jnp.abs(out - ref)) < 2e-3, float(jnp.max(jnp.abs(out - ref)))

    print("KERNEL_OK")
</pallas_src>

<mosaic_0001>
module attributes {stable_mosaic.version = 11 : i64} {
  func.func @_patch_embed_kernel(%arg0: i32, %arg1: memref<56x256xbf16, #tpu.memory_space<vmem>>, %arg2: memref<256x32xbf16, #tpu.memory_space<vmem>>, %arg3: memref<3x32xf32, #tpu.memory_space<vmem>>, %arg4: memref<56x32xf32, #tpu.memory_space<vmem>>) attributes {dimension_semantics = [#tpu.dimension_semantics<parallel>], iteration_bounds = array<i64: 1>, scalar_prefetch = 0 : i64, scratch_operands = 0 : i64, tpu.core_type = #tpu.core_type<tc>, window_params = [{transform_indices = @transform_0, window_bounds = array<i64: 56, 256>}, {pipeline_mode = #tpu.pipeline_mode<synchronous>, transform_indices = @transform_1, window_bounds = array<i64: 256, 32>}, {pipeline_mode = #tpu.pipeline_mode<synchronous>, transform_indices = @transform_2, window_bounds = array<i64: 3, 32>}, {transform_indices = @transform_3, window_bounds = array<i64: 56, 32>}]} {
    %c0 = arith.constant 0 : index
    %c0_0 = arith.constant 0 : index
    %0 = vector.load %arg1[%c0, %c0_0] : memref<56x256xbf16, #tpu.memory_space<vmem>>, vector<56x256xbf16>
    %c0_1 = arith.constant 0 : index
    %c0_2 = arith.constant 0 : index
    %1 = vector.load %arg2[%c0_1, %c0_2] : memref<256x32xbf16, #tpu.memory_space<vmem>>, vector<256x32xbf16>
    %cst = arith.constant dense<0.000000e+00> : vector<56x32xf32>
    %2 = tpu.matmul %0, %1, %cst {dimension_numbers = #tpu.dot_dimension_numbers<[1], [0], [0], [1], [0, 0, 1, 1], [], []>} : vector<56x256xbf16>, vector<256x32xbf16>, vector<56x32xf32> -> vector<56x32xf32>
    %c0_3 = arith.constant 0 : index
    %c0_4 = arith.constant 0 : index
    %3 = vector.load %arg3[%c0_3, %c0_4] : memref<3x32xf32, #tpu.memory_space<vmem>>, vector<1x32xf32>
    %4 = vector.broadcast %3 : vector<1x32xf32> to vector<56x32xf32>
    %5 = arith.addf %2, %4 : vector<56x32xf32>
    %cst_5 = arith.constant dense<0.000000e+00> : vector<56xf32>
    %6 = vector.multi_reduction <add>, %5, %cst_5 [1] : vector<56x32xf32> to vector<56xf32>
    %7 = vector.shape_cast %6 : vector<56xf32> to vector<56x1xf32>
    %cst_6 = arith.constant 3.125000e-02 : f32
    %8 = vector.broadcast %cst_6 : f32 to vector<56x1xf32>
    %9 = arith.mulf %7, %8 : vector<56x1xf32>
    %10 = arith.mulf %5, %5 : vector<56x32xf32>
    %cst_7 = arith.constant dense<0.000000e+00> : vector<56xf32>
    %11 = vector.multi_reduction <add>, %10, %cst_7 [1] : vector<56x32xf32> to vector<56xf32>
    %12 = vector.shape_cast %11 : vector<56xf32> to vector<56x1xf32>
    %cst_8 = arith.constant 3.125000e-02 : f32
    %13 = vector.broadcast %cst_8 : f32 to vector<56x1xf32>
    %14 = arith.mulf %12, %13 : vector<56x1xf32>
    %15 = arith.mulf %9, %9 : vector<56x1xf32>
    %16 = arith.subf %14, %15 : vector<56x1xf32>
    %17 = vector.broadcast %9 : vector<56x1xf32> to vector<56x32xf32>
    %18 = arith.subf %5, %17 : vector<56x32xf32>
    %cst_9 = arith.constant 9.99999974E-6 : f32
    %19 = vector.broadcast %cst_9 : f32 to vector<56x1xf32>
    %20 = arith.addf %16, %19 : vector<56x1xf32>
    %21 = math.rsqrt %20 : vector<56x1xf32>
    %22 = vector.broadcast %21 : vector<56x1xf32> to vector<56x32xf32>
    %23 = arith.mulf %18, %22 : vector<56x32xf32>
    %c1 = arith.constant 1 : index
    %c0_10 = arith.constant 0 : index
    %24 = vector.load %arg3[%c1, %c0_10] : memref<3x32xf32, #tpu.memory_space<vmem>>, vector<1x32xf32>
    %25 = vector.broadcast %24 : vector<1x32xf32> to vector<56x32xf32>
    %26 = arith.mulf %23, %25 : vector<56x32xf32>
    %c2 = arith.constant 2 : index
    %c0_11 = arith.constant 0 : index
    %27 = vector.load %arg3[%c2, %c0_11] : memref<3x32xf32, #tpu.memory_space<vmem>>, vector<1x32xf32>
    %28 = vector.broadcast %27 : vector<1x32xf32> to vector<56x32xf32>
    %29 = arith.addf %26, %28 : vector<56x32xf32>
    %c0_12 = arith.constant 0 : index
    %c0_13 = arith.constant 0 : index
    %30 = vector.load %arg4[%c0_12, %c0_13] : memref<56x32xf32, #tpu.memory_space<vmem>>, vector<56x32xf32>
    tpu.vector_store %arg4[%c0_12, %c0_13], %29 {strides = array<i32>} : memref<56x32xf32, #tpu.memory_space<vmem>>, vector<56x32xf32>,
    return
  }
  func.func @transform_0(%arg0: i32) -> (i32, i32) {
    %c0_i32 = arith.constant 0 : i32
    %c0_i32_0 = arith.constant 0 : i32
    return %arg0, %c0_i32 : i32, i32
  }
  func.func @transform_1(%arg0: i32) -> (i32, i32) {
    %c0_i32 = arith.constant 0 : i32
    %c0_i32_0 = arith.constant 0 : i32
    %c0_i32_1 = arith.constant 0 : i32
    return %c0_i32, %c0_i32_0 : i32, i32
  }
  func.func @transform_2(%arg0: i32) -> (i32, i32) {
    %c0_i32 = arith.constant 0 : i32
    %c0_i32_0 = arith.constant 0 : i32
    %c0_i32_1 = arith.constant 0 : i32
    return %c0_i32, %c0_i32_0 : i32, i32
  }
  func.func @transform_3(%arg0: i32) -> (i32, i32) {
    %c0_i32 = arith.constant 0 : i32
    %c0_i32_0 = arith.constant 0 : i32
    return %arg0, %c0_i32 : i32, i32
  }
}

</mosaic_0001>

<llo_original>
// kernel: patch_embed_forward.1
$region0: #{patch_embed_forward.1}
  #allocation0 [shape = 'u32[]', space=smem, size = 0x4, offset = 0x4, fixed_abs, tag = 'smem constant byte address 0x4 - core index']
  #allocation1 [shape = 'u32[72,128]{1,0:T(1,128)}', space=vmem, size = 0x9000, scoped, tag = 'internal scratch']
  %s0 = inlined_call_operand.vmem [shape: bf16[56,256], index: 0, kind: input, shape index: {}]
  %s1 = inlined_call_operand.vmem [shape: bf16[256,32], index: 1, kind: input, shape index: {}]
  %s2 = inlined_call_operand.vmem [shape: f32[3,32], index: 2, kind: input, shape index: {}]
  %s3 = inlined_call_operand.vmem [shape: f32[56,32], index: 3, kind: output, shape index: {}]
  %s4 = sld [smem:[#allocation0]]
  $region22: #{patch_embed_forward.1} parent=0
    _
  %s6 = ssub.s32 1, %s4
  %s7 = scalar_select 0, %s6, %s4
  // Predicated region
  $region2: #{patch_embed_forward.1} parent=0 // pred_check
    _
  $region3: #{patch_embed_forward.1} parent=0 // pred_check_branch
    %9 = sbr.rel (0) target = $region5
  $region4: #{patch_embed_forward.1} parent=0 // pred_region
    _
  $region5: #{patch_embed_forward.1} parent=0 // pred_fallthru
    _
  // Predicated region
  $region6: #{patch_embed_forward.1} parent=0 // pred_check
    _
  $region7: #{patch_embed_forward.1} parent=0 // pred_check_branch
    %11 = sbr.rel (0) target = $region9
  $region8: #{patch_embed_forward.1} parent=0 // pred_region
    _
  $region9: #{patch_embed_forward.1} parent=0 // pred_fallthru
    _
  // Predicated region
  $region10: #{patch_embed_forward.1} parent=0 // pred_check
    _
  $region11: #{patch_embed_forward.1} parent=0 // pred_check_branch
    %13 = sbr.rel (0) target = $region13
  $region12: #{patch_embed_forward.1} parent=0 // pred_region
    _
  $region13: #{patch_embed_forward.1} parent=0 // pred_fallthru
    _
  %v14 = vld [vmem:[%s0] sm:$0xff]
  %v15 = vld [vmem:[%s0 + $0x8] sm:$0xff]
  %v16 = vld [vmem:[%s0 + $0x10] sm:$0xff]
  %v17 = vld [vmem:[%s0 + $0x18] sm:$0xff]
  %v18 = vld [vmem:[%s0 + $0x20] sm:$0xff]
  %v19 = vld [vmem:[%s0 + $0x28] sm:$0xff]
  %v20 = vld [vmem:[%s0 + $0x30] sm:$0xff]
  %v21 = vld [vmem:[%s1] sm:$0xf]
  %v22 = vld [vmem:[%s1 + $0x4] sm:$0xf]
  %v23 = vld [vmem:[%s1 + $0x8] sm:$0xf]
  %v24 = vld [vmem:[%s1 + $0xc] sm:$0xf]
  %v25 = vld [vmem:[%s1 + $0x10] sm:$0xf]
  %v26 = vld [vmem:[%s1 + $0x14] sm:$0xf]
  %v27 = vld [vmem:[%s1 + $0x18] sm:$0xf]
  %v28 = vld [vmem:[%s1 + $0x1c] sm:$0xf]
  %v29 = vld [vmem:[%s1 + $0x20] sm:$0xf]
  %v30 = vld [vmem:[%s1 + $0x24] sm:$0xf]
  %v31 = vld [vmem:[%s1 + $0x28] sm:$0xf]
  %v32 = vld [vmem:[%s1 + $0x2c] sm:$0xf]
  %v33 = vld [vmem:[%s1 + $0x30] sm:$0xf]
  %v34 = vld [vmem:[%s1 + $0x34] sm:$0xf]
  %v35 = vld [vmem:[%s1 + $0x38] sm:$0xf]
  %v36 = vld [vmem:[%s1 + $0x3c] sm:$0xf]
  %v37 = vld [vmem:[%s1 + $0x40] sm:$0xf]
  %v38 = vld [vmem:[%s1 + $0x44] sm:$0xf]
  %v39 = vld [vmem:[%s1 + $0x48] sm:$0xf]
  %v40 = vld [vmem:[%s1 + $0x4c] sm:$0xf]
  %v41 = vld [vmem:[%s1 + $0x50] sm:$0xf]
  %v42 = vld [vmem:[%s1 + $0x54] sm:$0xf]
  %v43 = vld [vmem:[%s1 + $0x58] sm:$0xf]
  %v44 = vld [vmem:[%s1 + $0x5c] sm:$0xf]
  %v45 = vld [vmem:[%s1 + $0x60] sm:$0xf]
  %v46 = vld [vmem:[%s1 + $0x64] sm:$0xf]
  %v47 = vld [vmem:[%s1 + $0x68] sm:$0xf]
  %v48 = vld [vmem:[%s1 + $0x6c] sm:$0xf]
  %v49 = vld [vmem:[%s1 + $0x70] sm:$0xf]
  %v50 = vld [vmem:[%s1 + $0x74] sm:$0xf]
  %v51 = vld [vmem:[%s1 + $0x78] sm:$0xf]
  %v52 = vld [vmem:[%s1 + $0x7c] sm:$0xf]
  %v53 = vld [vmem:[%s2] sm:$0x1]
  %v54 = vperm.slane %v53, 0
  %v62 = vunpack.c.l.b16 %v14
  %v63 = vunpack.c.h.b16 %v14
  %v64 = vunpack.c.l.b16 %v15
  %v65 = vunpack.c.h.b16 %v15
  %v66 = vunpack.c.l.b16 %v16
  %v67 = vunpack.c.h.b16 %v16
  %v68 = vunpack.c.l.b16 %v17
  %v69 = vunpack.c.h.b16 %v17
  %v70 = vunpack.c.l.b16 %v18
  %v71 = vunpack.c.h.b16 %v18
  %v72 = vunpack.c.l.b16 %v19
  %v73 = vunpack.c.h.b16 %v19
  %v74 = vunpack.c.l.b16 %v20
  %v75 = vunpack.c.h.b16 %v20
  %v76 = vpack.c.b16 %v64, %v62
  %v77 = vpack.c.b16 %v65, %v63
  %v78 = vpack.c.b16 %v68, %v66
  %v79 = vpack.c.b16 %v69, %v67
  %v80 = vpack.c.b16 %v72, %v70
  %v81 = vpack.c.b16 %v73, %v71
  %v82 = vpack.c.b16 %v74, %v74
  %v83 = vpack.c.b16 %v75, %v75
  %v124 = vunpack.c.l.b16 %v21
  %v125 = vunpack.c.l.b16 %v22
  %v126 = vunpack.c.l.b16 %v23
  %v127 = vunpack.c.l.b16 %v24
  %v128 = vunpack.c.l.b16 %v25
  %v129 = vunpack.c.l.b16 %v26
  %v130 = vunpack.c.l.b16 %v27
  %v131 = vunpack.c.l.b16 %v28
  %v132 = vunpack.c.l.b16 %v29
  %v133 = vunpack.c.l.b16 %v30
  %v134 = vunpack.c.l.b16 %v31
  %v135 = vunpack.c.l.b16 %v32
  %v136 = vunpack.c.l.b16 %v33
  %v137 = vunpack.c.l.b16 %v34
  %v138 = vunpack.c.l.b16 %v35
  %v139 = vunpack.c.l.b16 %v36
  %v140 = vunpack.c.l.b16 %v37
  %v141 = vunpack.c.l.b16 %v38
  %v142 = vunpack.c.l.b16 %v39
  %v143 = vunpack.c.l.b16 %v40
  %v144 = vunpack.c.l.b16 %v41
  %v145 = vunpack.c.l.b16 %v42
  %v146 = vunpack.c.l.b16 %v43
  %v147 = vunpack.c.l.b16 %v44
  %v148 = vunpack.c.l.b16 %v45
  %v149 = vunpack.c.l.b16 %v46
  %v150 = vunpack.c.l.b16 %v47
  %v151 = vunpack.c.l.b16 %v48
  %v152 = vunpack.c.l.b16 %v49
  %v153 = vunpack.c.l.b16 %v50
  %v154 = vunpack.c.l.b16 %v51
  %v155 = vunpack.c.l.b16 %v52
  %v156 = vpack.c.b16 %v125, %v124
  %v157 = vpack.c.b16 %v127, %v126
  %v158 = vpack.c.b16 %v129, %v128
  %v159 = vpack.c.b16 %v131, %v130
  %v160 = vpack.c.b16 %v133, %v132
  %v161 = vpack.c.b16 %v135, %v134
  %v162 = vpack.c.b16 %v137, %v136
  %v163 = vpack.c.b16 %v139, %v138
  %v164 = vpack.c.b16 %v141, %v140
  %v165 = vpack.c.b16 %v143, %v142
  %v166 = vpack.c.b16 %v145, %v144
  %v167 = vpack.c.b16 %v147, %v146
  %v168 = vpack.c.b16 %v149, %v148
  %v169 = vpack.c.b16 %v151, %v150
  %v170 = vpack.c.b16 %v153, %v152
  %v171 = vpack.c.b16 %v155, %v154
  %188 = vmatpush.bf16.msra.mxu0 %v163
  %189 = vmatpush.bf16.msra.mxu0 %v162
  %190 = vmatpush.bf16.msra.mxu0 %v161
  %191 = vmatpush.bf16.msra.mxu0 %v160
  %192 = vmatpush.bf16.msra.mxu0 %v159
  %193 = vmatpush.bf16.msra.mxu0 %v158
  %194 = vmatpush.bf16.msra.mxu0 %v157
  %195 = vmatpush.bf16.msra.mxu0 %v156
  %196 = vmatmul.bf16.gmra.mxu0 %v76
  %v197 = vpop.f32.mrf.mxu0
  %v198 = vadd.f32 %v54, %v197
  %v199 = vpop.f32.mrf.mxu0
  %v200 = vadd.f32 %v54, %v199
  %201 = vmatmul.bf16.gmra.mxu0 %v78
  %v202 = vpop.f32.mrf.mxu0
  %v203 = vadd.f32 %v54, %v202
  %v204 = vpop.f32.mrf.mxu0
  %v205 = vadd.f32 %v54, %v204
  %206 = vmatmul.bf16.gmra.mxu0 %v80
  %v207 = vpop.f32.mrf.mxu0
  %v208 = vadd.f32 %v54, %v207
  %v209 = vpop.f32.mrf.mxu0
  %v210 = vadd.f32 %v54, %v209
  %211 = vmatmul.bf16.gmra.mxu0 %v82
  %v212 = vpop.f32.mrf.mxu0
  %v213 = vadd.f32 %v54, %v212
  %v214 = vpop.f32.mrf.mxu0
  %215 = vdwg.mxu0
  %216 = vmatpush.bf16.msra.mxu0 %v171
  %217 = vmatpush.bf16.msra.mxu0 %v170
  %218 = vmatpush.bf16.msra.mxu0 %v169
  %219 = vmatpush.bf16.msra.mxu0 %v168
  %220 = vmatpush.bf16.msra.mxu0 %v167
  %221 = vmatpush.bf16.msra.mxu0 %v166
  %222 = vmatpush.bf16.msra.mxu0 %v165
  %223 = vmatpush.bf16.msra.mxu0 %v164
  %224 = vmatmul.bf16.gmra.mxu0 %v77
  %v225 = vpop.f32.mrf.mxu0
  %v226 = vadd.f32 %v198, %v225
  %v227 = vpop.f32.mrf.mxu0
  %v228 = vadd.f32 %v200, %v227
  %229 = vmatmul.bf16.gmra.mxu0 %v79
  %v230 = vpop.f32.mrf.mxu0
  %v231 = vadd.f32 %v203, %v230
  %v232 = vpop.f32.mrf.mxu0
  %v233 = vadd.f32 %v205, %v232
  %234 = vmatmul.bf16.gmra.mxu0 %v81
  %v235 = vpop.f32.mrf.mxu0
  %v236 = vadd.f32 %v208, %v235
  %v237 = vpop.f32.mrf.mxu0
  %v238 = vadd.f32 %v210, %v237
  %239 = vmatmul.bf16.gmra.mxu0 %v83
  %v240 = vpop.f32.mrf.mxu0
  %v241 = vadd.f32 %v213, %v240
  %v242 = vpop.f32.mrf.mxu0
  %243 = vdwg.mxu0
  %vm244 = vcmask 261120
  %v245 = vsel %vm244, %v226, 0.0
  %246 = vadd.xlane.f32.xlu0 %v245
  %v247 = vpop.xlane.xlu0 %246
  %v248 = vsel %vm244, %v228, 0.0
  %249 = vadd.xlane.f32.xlu0 %v248
  %v250 = vpop.xlane.xlu0 %249
  %v251 = vsel %vm244, %v231, 0.0
  %252 = vadd.xlane.f32.xlu0 %v251
  %v253 = vpop.xlane.xlu0 %252
  %v254 = vsel %vm244, %v233, 0.0
  %255 = vadd.xlane.f32.xlu0 %v254
  %v256 = vpop.xlane.xlu0 %255
  %v257 = vsel %vm244, %v236, 0.0
  %258 = vadd.xlane.f32.xlu0 %v257
  %v259 = vpop.xlane.xlu0 %258
  %v260 = vsel %vm244, %v238, 0.0
  %261 = vadd.xlane.f32.xlu0 %v260
  %v262 = vpop.xlane.xlu0 %261
  %v263 = vsel %vm244, %v241, 0.0
  %264 = vadd.xlane.f32.xlu0 %v263
  %v265 = vpop.xlane.xlu0 %264
  %v266 = vmul.f32 %v247, 0.03125
  %v267 = vmul.f32 %v250, 0.03125
  %v268 = vmul.f32 %v253, 0.03125
  %v269 = vmul.f32 %v256, 0.03125
  %v270 = vmul.f32 %v259, 0.03125
  %v271 = vmul.f32 %v262, 0.03125
  %v272 = vmul.f32 %v265, 0.03125
  %v273 = vmul.f32 %v226, %v226
  %v274 = vmul.f32 %v228, %v228
  %v275 = vmul.f32 %v231, %v231
  %v276 = vmul.f32 %v233, %v233
  %v277 = vmul.f32 %v236, %v236
  %v278 = vmul.f32 %v238, %v238
  %v279 = vmul.f32 %v241, %v241
  %v280 = vsel %vm244, %v273, 0.0
  %281 = vadd.xlane.f32.xlu0 %v280
  %v282 = vpop.xlane.xlu0 %281
  %v283 = vsel %vm244, %v274, 0.0
  %284 = vadd.xlane.f32.xlu0 %v283
  %v285 = vpop.xlane.xlu0 %284
  %v286 = vsel %vm244, %v275, 0.0
  %287 = vadd.xlane.f32.xlu0 %v286
  %v288 = vpop.xlane.xlu0 %287
  %v289 = vsel %vm244, %v276, 0.0
  %290 = vadd.xlane.f32.xlu0 %v289
  %v291 = vpop.xlane.xlu0 %290
  %v292 = vsel %vm244, %v277, 0.0
  %293 = vadd.xlane.f32.xlu0 %v292
  %v294 = vpop.xlane.xlu0 %293
  %v295 = vsel %vm244, %v278, 0.0
  %296 = vadd.xlane.f32.xlu0 %v295
  %v297 = vpop.xlane.xlu0 %296
  %v298 = vsel %vm244, %v279, 0.0
  %299 = vadd.xlane.f32.xlu0 %v298
  %v300 = vpop.xlane.xlu0 %299
  %v301 = vmul.f32 %v282, 0.03125
  %v302 = vmul.f32 %v285, 0.03125
  %v303 = vmul.f32 %v288, 0.03125
  %v304 = vmul.f32 %v291, 0.03125
  %v305 = vmul.f32 %v294, 0.03125
  %v306 = vmul.f32 %v297, 0.03125
  %v307 = vmul.f32 %v300, 0.03125
  %v308 = vmul.f32 %v266, %v266
  %v309 = vmul.f32 %v267, %v267
  %v310 = vmul.f32 %v268, %v268
  %v311 = vmul.f32 %v269, %v269
  %v312 = vmul.f32 %v270, %v270
  %v313 = vmul.f32 %v271, %v271
  %v314 = vmul.f32 %v272, %v272
  %v315 = vsub.f32 %v301, %v308
  %v316 = vsub.f32 %v302, %v309
  %v317 = vsub.f32 %v303, %v310
  %v318 = vsub.f32 %v304, %v311
  %v319 = vsub.f32 %v305, %v312
  %v320 = vsub.f32 %v306, %v313
  %v321 = vsub.f32 %v307, %v314
  %v322 = vsub.f32 %v226, %v266
  %v323 = vsub.f32 %v228, %v267
  %v324 = vsub.f32 %v231, %v268
  %v325 = vsub.f32 %v233, %v269
  %v326 = vsub.f32 %v236, %v270
  %v327 = vsub.f32 %v238, %v271
  %v328 = vsub.f32 %v241, %v272
  %v329 = vadd.f32 %v315, 1e-05
  %v330 = vadd.f32 %v316, 1e-05
  %v331 = vadd.f32 %v317, 1e-05
  %v332 = vadd.f32 %v318, 1e-05
  %v333 = vadd.f32 %v319, 1e-05
  %v334 = vadd.f32 %v320, 1e-05
  %v335 = vadd.f32 %v321, 1e-05
  %v336 = vrsqrt.pop %v329
  %v337 = vmul.f32 %v336, %v329
  %v338 = vmul.f32 %v337, %v336
  %v339 = vmul.f32 0.5, %v338
  %v340 = vsub.f32 1.5, %v339
  %v341 = vmul.f32 %v336, %v340
  %vm342 = vweird.f32 %v329
  %vm343 = vweird.f32 %v336
  %vm344 = vmor %vm342, %vm343
  %v345 = vsel %vm344, %v336, %v341
  %v346 = vrsqrt.pop %v330
  %v347 = vmul.f32 %v346, %v330
  %v348 = vmul.f32 %v347, %v346
  %v349 = vmul.f32 0.5, %v348
  %v350 = vsub.f32 1.5, %v349
  %v351 = vmul.f32 %v346, %v350
  %vm352 = vweird.f32 %v330
  %vm353 = vweird.f32 %v346
  %vm354 = vmor %vm352, %vm353
  %v355 = vsel %vm354, %v346, %v351
  %v356 = vrsqrt.pop %v331
  %v357 = vmul.f32 %v356, %v331
  %v358 = vmul.f32 %v357, %v356
  %v359 = vmul.f32 0.5, %v358
  %v360 = vsub.f32 1.5, %v359
  %v361 = vmul.f32 %v356, %v360
  %vm362 = vweird.f32 %v331
  %vm363 = vweird.f32 %v356
  %vm364 = vmor %vm362, %vm363
  %v365 = vsel %vm364, %v356, %v361
  %v366 = vrsqrt.pop %v332
  %v367 = vmul.f32 %v366, %v332
  %v368 = vmul.f32 %v367, %v366
  %v369 = vmul.f32 0.5, %v368
  %v370 = vsub.f32 1.5, %v369
  %v371 = vmul.f32 %v366, %v370
  %vm372 = vweird.f32 %v332
  %vm373 = vweird.f32 %v366
  %vm374 = vmor %vm372, %vm373
  %v375 = vsel %vm374, %v366, %v371
  %v376 = vrsqrt.pop %v333
  %v377 = vmul.f32 %v376, %v333
  %v378 = vmul.f32 %v377, %v376
  %v379 = vmul.f32 0.5, %v378
  %v380 = vsub.f32 1.5, %v379
  %v381 = vmul.f32 %v376, %v380
  %vm382 = vweird.f32 %v333
  %vm383 = vweird.f32 %v376
  %vm384 = vmor %vm382, %vm383
  %v385 = vsel %vm384, %v376, %v381
  %v386 = vrsqrt.pop %v334
  %v387 = vmul.f32 %v386, %v334
  %v388 = vmul.f32 %v387, %v386
  %v389 = vmul.f32 0.5, %v388
  %v390 = vsub.f32 1.5, %v389
  %v391 = vmul.f32 %v386, %v390
  %vm392 = vweird.f32 %v334
  %vm393 = vweird.f32 %v386
  %vm394 = vmor %vm392, %vm393
  %v395 = vsel %vm394, %v386, %v391
  %v396 = vrsqrt.pop %v335
  %v397 = vmul.f32 %v396, %v335
  %v398 = vmul.f32 %v397, %v396
  %v399 = vmul.f32 0.5, %v398
  %v400 = vsub.f32 1.5, %v399
  %v401 = vmul.f32 %v396, %v400
  %vm402 = vweird.f32 %v335
  %vm403 = vweird.f32 %v396
  %vm404 = vmor %vm402, %vm403
  %v405 = vsel %vm404, %v396, %v401
  %v406 = vmul.f32 %v322, %v345
  %v407 = vmul.f32 %v323, %v355
  %v408 = vmul.f32 %v324, %v365
  %v409 = vmul.f32 %v325, %v375
  %v410 = vmul.f32 %v326, %v385
  %v411 = vmul.f32 %v327, %v395
  %v412 = vmul.f32 %v328, %v405
  %v413 = vld [vmem:[%s2 + $0x1] sm:$0x1]
  %v414 = vperm.slane %v413, 0
  %v415 = vmul.f32 %v406, %v414
  %v416 = vmul.f32 %v407, %v414
  %v417 = vmul.f32 %v408, %v414
  %v418 = vmul.f32 %v409, %v414
  %v419 = vmul.f32 %v410, %v414
  %v420 = vmul.f32 %v411, %v414
  %v421 = vmul.f32 %v412, %v414
  %v422 = vld [vmem:[%s2 + $0x2] sm:$0x1]
  %v423 = vperm.slane %v422, 0
  %v424 = vadd.f32 %v415, %v423
  %v425 = vadd.f32 %v416, %v423
  %v426 = vadd.f32 %v417, %v423
  %v427 = vadd.f32 %v418, %v423
  %v428 = vadd.f32 %v419, %v423
  %v429 = vadd.f32 %v420, %v423
  %v430 = vadd.f32 %v421, %v423
  %431 = vst.msk [vmem:[%s3] sm:$0xff] %vm244, %v424
  %432 = vst.msk [vmem:[%s3 + $0x8] sm:$0xff] %vm244, %v425
  %433 = vst.msk [vmem:[%s3 + $0x10] sm:$0xff] %vm244, %v426
  %434 = vst.msk [vmem:[%s3 + $0x18] sm:$0xff] %vm244, %v427
  %435 = vst.msk [vmem:[%s3 + $0x20] sm:$0xff] %vm244, %v428
  %436 = vst.msk [vmem:[%s3 + $0x28] sm:$0xff] %vm244, %v429
  %437 = vst.msk [vmem:[%s3 + $0x30] sm:$0xff] %vm244, %v430
  // Predicated region
  $region14: #{patch_embed_forward.1} parent=0 // pred_check
    _
  $region15: #{patch_embed_forward.1} parent=0 // pred_check_branch
    %439 = sbr.rel (0) target = $region17
  $region16: #{patch_embed_forward.1} parent=0 // pred_region
    _
  $region17: #{patch_embed_forward.1} parent=0 // pred_fallthru
    _
  // Predicated region
  $region18: #{patch_embed_forward.1} parent=0 // pred_check
    _
  $region19: #{patch_embed_forward.1} parent=0 // pred_check_branch
    %441 = sbr.rel (0) target = $region21
  $region20: #{patch_embed_forward.1} parent=0 // pred_region
    _
  $region21: #{patch_embed_forward.1} parent=0 // pred_fallthru
    _

</llo_original>
